<compile_context>
chip_gen: v7x
topology: tpu7x:2x2x1
jax: 0.10.0
libtpu: 0.0.40
codegen_flags: <defaults>
</compile_context>

<pallas_src>
import numpy as np
import jax
import jax.numpy as jnp
from jax import lax
from jax.experimental import pallas as pl
from jax.experimental.pallas import tpu as pltpu


def _quant_dequant(x, num_bits=8):
    # TODO(synk): utils.quantize_tensor/dequantize_tensor are external and not
    # provided; this is the standard 8-bit affine (min/max) quantize-dequantize
    # round-trip commonly paired with that utils module.
    qmin, qmax = 0.0, 2.0 ** num_bits - 1.0
    min_val = jnp.min(x)
    max_val = jnp.max(x)
    scale = jnp.maximum((max_val - min_val) / (qmax - qmin), 1e-12)
    zero_point = jnp.clip(jnp.round(qmin - min_val / scale), qmin, qmax)
    q = jnp.clip(jnp.round(zero_point + x / scale), qmin, qmax)
    return scale * (q - zero_point)


def _transmission_kernel(xr_ref, xi_ref, cp_ref, sp_ref, cd_ref, sd_ref,
                         yr_ref, yi_ref):
    xr = xr_ref[...]            # (2, TP)  real(x)
    xi = xi_ref[...]            # (2, TP)  imag(x)
    cp = cp_ref[...]            # (1, TP)  cos(phase)
    sp = sp_ref[...]            # (1, TP)  sin(phase)
    cd = cd_ref[...]            # (1, TP)  cos(delta_dq / 2)
    sd = sd_ref[...]            # (1, TP)  sin(delta_dq / 2)

    # grometry_mask sign per channel: +1 for row 0, -1 for row 1.
    sign = 1.0 - 2.0 * lax.broadcasted_iota(jnp.int32, xr.shape, 0).astype(jnp.float32)
    sps = sign * sp             # channel-signed sin(phase), (2, TP)

    # temp = x * (cos(new_phase) + i * sin(new_phase))
    tr = xr * cp - xi * sps
    ti = xr * sps + xi * cp

    # output = cos(d/2) - 1j * sin(d/2) * temp
    yr_ref[...] = cd + sd * ti
    yi_ref[...] = -(sd * tr)


def transmission_layer(x, phase, delta, *, lane_tile=128 * 1024):
    """Forward of TransmissionLayer.

    x     : (2, H, W) complex64   -- the two polarization channels
    phase : (H, W)    float32     -- learnable phase parameter
    delta : (H, W)    float32     -- learnable delta parameter
    returns (2, H, W) complex64
    """
    C, H, W = x.shape
    assert C == 2, "TransmissionLayer forward indexes exactly 2 channels"
    P = H * W

    xr = jnp.real(x).astype(jnp.float32).reshape(C, P)
    xi = jnp.imag(x).astype(jnp.float32).reshape(C, P)

    # Parameter-derived per-pixel coefficients (tiny (H, W) pass; these are
    # batch-independent layer constants, so they are hoisted to the wrapper).
    phase = phase.astype(jnp.float32)
    delta_dq = _quant_dequant(delta.astype(jnp.float32))
    cp = jnp.cos(phase).reshape(1, P)
    sp = jnp.sin(phase).reshape(1, P)
    cd = jnp.cos(0.5 * delta_dq).reshape(1, P)
    sd = jnp.sin(0.5 * delta_dq).reshape(1, P)

    # Lane-dense tiling of the flattened pixel axis.
    if P >= lane_tile:
        tp = lane_tile
    else:
        tp = ((P + 127) // 128) * 128          # round up to full lanes
    p_pad = ((P + tp - 1) // tp) * tp
    pad = p_pad - P
    if pad:
        cfg = ((0, 0), (0, pad))
        xr, xi = jnp.pad(xr, cfg), jnp.pad(xi, cfg)
        cp, sp = jnp.pad(cp, cfg), jnp.pad(sp, cfg)
        cd, sd = jnp.pad(cd, cfg), jnp.pad(sd, cfg)

    grid = (p_pad // tp,)
    x_spec = pl.BlockSpec((C, tp), lambda i: (0, i))
    prm_spec = pl.BlockSpec((1, tp), lambda i: (0, i))

    flops = 10 * C * p_pad
    bytes_accessed = 4 * p_pad * (2 * C + 4 + 2 * C)   # in planes + params + out planes

    yr, yi = pl.pallas_call(
        _transmission_kernel,
        out_shape=(jax.ShapeDtypeStruct((C, p_pad), jnp.float32),
                   jax.ShapeDtypeStruct((C, p_pad), jnp.float32)),
        grid_spec=pltpu.PrefetchScalarGridSpec(
            num_scalar_prefetch=0,
            grid=grid,
            in_specs=[x_spec, x_spec, prm_spec, prm_spec, prm_spec, prm_spec],
            out_specs=[x_spec, x_spec],
        ),
        compiler_params=pltpu.CompilerParams(
            dimension_semantics=("parallel",)),
        cost_estimate=pl.CostEstimate(flops=flops, transcendentals=0,
                                      bytes_accessed=bytes_accessed),
    )(xr, xi, cp, sp, cd, sd)

    yr = yr[:, :P].reshape(C, H, W)
    yi = yi[:, :P].reshape(C, H, W)
    # TODO(synk): complex dtypes are not supported inside Pallas TPU kernels;
    # the real/imag split and recombine are left to XLA in this wrapper.
    return (yr + 1j * yi).astype(jnp.complex64)


def _reference(x, phase, delta):
    """Pure-JAX reference with the torch module's semantics."""
    geometry = jnp.stack([jnp.ones_like(phase), -jnp.ones_like(phase)], 0)
    new_phase = geometry * phase
    mask = jnp.cos(new_phase) + 1j * jnp.sin(new_phase)
    temp = x * mask
    d = _quant_dequant(delta.astype(jnp.float32))
    now_cos = jnp.cos(d / 2)
    now_sin = jnp.sin(d / 2)
    matrix_i = 1j * jnp.ones_like(phase)
    out0 = now_cos - matrix_i * now_sin * temp[0]
    out1 = now_cos - matrix_i * now_sin * temp[1]
    return jnp.stack([out0, out1], 0).astype(jnp.complex64)


if __name__ == "__main__":
    img_size = 16
    key = jax.random.PRNGKey(0)
    k1, k2, k3, k4 = jax.random.split(key, 4)

    phase = 2.0 * jnp.pi * jax.random.uniform(k1, (img_size, img_size), jnp.float32)
    delta = 2.0 * jnp.pi * jax.random.uniform(k2, (img_size, img_size), jnp.float32)
    x = (jax.random.normal(k3, (2, img_size, img_size), jnp.float32)
         + 1j * jax.random.normal(k4, (2, img_size, img_size), jnp.float32)
         ).astype(jnp.complex64)

    out = transmission_layer(x, phase, delta)
    out = jax.block_until_ready(out)

    ref = _reference(x, phase, delta)
    np.testing.assert_allclose(np.asarray(out), np.asarray(ref),
                               rtol=1e-4, atol=1e-4)

    print("KERNEL_OK")
</pallas_src>

<mosaic_0001>
module attributes {stable_mosaic.version = 11 : i64} {
  func.func @_transmission_kernel(%arg0: i32, %arg1: memref<2x256xf32, #tpu.memory_space<vmem>>, %arg2: memref<2x256xf32, #tpu.memory_space<vmem>>, %arg3: memref<1x256xf32, #tpu.memory_space<vmem>>, %arg4: memref<1x256xf32, #tpu.memory_space<vmem>>, %arg5: memref<1x256xf32, #tpu.memory_space<vmem>>, %arg6: memref<1x256xf32, #tpu.memory_space<vmem>>, %arg7: memref<2x256xf32, #tpu.memory_space<vmem>>, %arg8: memref<2x256xf32, #tpu.memory_space<vmem>>) attributes {dimension_semantics = [#tpu.dimension_semantics<parallel>], iteration_bounds = array<i64: 1>, scalar_prefetch = 0 : i64, scratch_operands = 0 : i64, tpu.core_type = #tpu.core_type<tc>, window_params = [{transform_indices = @transform_0, window_bounds = array<i64: 2, 256>}, {transform_indices = @transform_1, window_bounds = array<i64: 2, 256>}, {transform_indices = @transform_2, window_bounds = array<i64: 1, 256>}, {transform_indices = @transform_3, window_bounds = array<i64: 1, 256>}, {transform_indices = @transform_4, window_bounds = array<i64: 1, 256>}, {transform_indices = @transform_5, window_bounds = array<i64: 1, 256>}, {transform_indices = @transform_6, window_bounds = array<i64: 2, 256>}, {transform_indices = @transform_7, window_bounds = array<i64: 2, 256>}]} {
    %c0 = arith.constant 0 : index
    %c0_0 = arith.constant 0 : index
    %0 = vector.load %arg1[%c0, %c0_0] : memref<2x256xf32, #tpu.memory_space<vmem>>, vector<2x256xf32>
    %c0_1 = arith.constant 0 : index
    %c0_2 = arith.constant 0 : index
    %1 = vector.load %arg2[%c0_1, %c0_2] : memref<2x256xf32, #tpu.memory_space<vmem>>, vector<2x256xf32>
    %c0_3 = arith.constant 0 : index
    %c0_4 = arith.constant 0 : index
    %2 = vector.load %arg3[%c0_3, %c0_4] : memref<1x256xf32, #tpu.memory_space<vmem>>, vector<1x256xf32>
    %c0_5 = arith.constant 0 : index
    %c0_6 = arith.constant 0 : index
    %3 = vector.load %arg4[%c0_5, %c0_6] : memref<1x256xf32, #tpu.memory_space<vmem>>, vector<1x256xf32>
    %c0_7 = arith.constant 0 : index
    %c0_8 = arith.constant 0 : index
    %4 = vector.load %arg5[%c0_7, %c0_8] : memref<1x256xf32, #tpu.memory_space<vmem>>, vector<1x256xf32>
    %c0_9 = arith.constant 0 : index
    %c0_10 = arith.constant 0 : index
    %5 = vector.load %arg6[%c0_9, %c0_10] : memref<1x256xf32, #tpu.memory_space<vmem>>, vector<1x256xf32>
    %6 = tpu.iota {dimensions = array<i32: 0>} : vector<2x256xi32>
    %7 = arith.sitofp %6 : vector<2x256xi32> to vector<2x256xf32>
    %cst = arith.constant 2.000000e+00 : f32
    %8 = vector.broadcast %cst : f32 to vector<2x256xf32>
    %9 = arith.mulf %8, %7 : vector<2x256xf32>
    %cst_11 = arith.constant 1.000000e+00 : f32
    %10 = vector.broadcast %cst_11 : f32 to vector<2x256xf32>
    %11 = arith.subf %10, %9 : vector<2x256xf32>
    %12 = vector.broadcast %3 : vector<1x256xf32> to vector<2x256xf32>
    %13 = arith.mulf %11, %12 : vector<2x256xf32>
    %14 = vector.broadcast %2 : vector<1x256xf32> to vector<2x256xf32>
    %15 = arith.mulf %0, %14 : vector<2x256xf32>
    %16 = arith.mulf %1, %13 : vector<2x256xf32>
    %17 = arith.subf %15, %16 : vector<2x256xf32>
    %18 = arith.mulf %0, %13 : vector<2x256xf32>
    %19 = vector.broadcast %2 : vector<1x256xf32> to vector<2x256xf32>
    %20 = arith.mulf %1, %19 : vector<2x256xf32>
    %21 = arith.addf %18, %20 : vector<2x256xf32>
    %22 = vector.broadcast %5 : vector<1x256xf32> to vector<2x256xf32>
    %23 = arith.mulf %22, %21 : vector<2x256xf32>
    %24 = vector.broadcast %4 : vector<1x256xf32> to vector<2x256xf32>
    %25 = arith.addf %24, %23 : vector<2x256xf32>
    %c0_12 = arith.constant 0 : index
    %c0_13 = arith.constant 0 : index
    %26 = vector.load %arg7[%c0_12, %c0_13] : memref<2x256xf32, #tpu.memory_space<vmem>>, vector<2x256xf32>
    tpu.vector_store %arg7[%c0_12, %c0_13], %25 {strides = array<i32>} : memref<2x256xf32, #tpu.memory_space<vmem>>, vector<2x256xf32>,
    %27 = vector.broadcast %5 : vector<1x256xf32> to vector<2x256xf32>
    %28 = arith.mulf %27, %17 : vector<2x256xf32>
    %cst_14 = arith.constant 0.000000e+00 : f32
    %29 = vector.broadcast %cst_14 : f32 to vector<2x256xf32>
    %30 = arith.subf %29, %28 : vector<2x256xf32>
    %c0_15 = arith.constant 0 : index
    %c0_16 = arith.constant 0 : index
    %31 = vector.load %arg8[%c0_15, %c0_16] : memref<2x256xf32, #tpu.memory_space<vmem>>, vector<2x256xf32>
    tpu.vector_store %arg8[%c0_15, %c0_16], %30 {strides = array<i32>} : memref<2x256xf32, #tpu.memory_space<vmem>>, vector<2x256xf32>,
    return
  }
  func.func @transform_0(%arg0: i32) -> (i32, i32) {
    %c0_i32 = arith.constant 0 : i32
    %c0_i32_0 = arith.constant 0 : i32
    return %c0_i32, %arg0 : i32, i32
  }
  func.func @transform_1(%arg0: i32) -> (i32, i32) {
    %c0_i32 = arith.constant 0 : i32
    %c0_i32_0 = arith.constant 0 : i32
    return %c0_i32, %arg0 : i32, i32
  }
  func.func @transform_2(%arg0: i32) -> (i32, i32) {
    %c0_i32 = arith.constant 0 : i32
    %c0_i32_0 = arith.constant 0 : i32
    return %c0_i32, %arg0 : i32, i32
  }
  func.func @transform_3(%arg0: i32) -> (i32, i32) {
    %c0_i32 = arith.constant 0 : i32
    %c0_i32_0 = arith.constant 0 : i32
    return %c0_i32, %arg0 : i32, i32
  }
  func.func @transform_4(%arg0: i32) -> (i32, i32) {
    %c0_i32 = arith.constant 0 : i32
    %c0_i32_0 = arith.constant 0 : i32
    return %c0_i32, %arg0 : i32, i32
  }
  func.func @transform_5(%arg0: i32) -> (i32, i32) {
    %c0_i32 = arith.constant 0 : i32
    %c0_i32_0 = arith.constant 0 : i32
    return %c0_i32, %arg0 : i32, i32
  }
  func.func @transform_6(%arg0: i32) -> (i32, i32) {
    %c0_i32 = arith.constant 0 : i32
    %c0_i32_0 = arith.constant 0 : i32
    return %c0_i32, %arg0 : i32, i32
  }
  func.func @transform_7(%arg0: i32) -> (i32, i32) {
    %c0_i32 = arith.constant 0 : i32
    %c0_i32_0 = arith.constant 0 : i32
    return %c0_i32, %arg0 : i32, i32
  }
}

</mosaic_0001>

<llo_original>
// kernel: tpu_custom_call.1
$region0: #{tpu_custom_call.1}
  #allocation0 [shape = 'u32[]', space=smem, size = 0x4, offset = 0x4, fixed_abs, tag = 'smem constant byte address 0x4 - core index']
  #allocation1 [shape = 'u32[144,128]{1,0:T(1,128)}', space=vmem, size = 0x12000, scoped, tag = 'internal scratch']
  %s0 = inlined_call_operand.hbm [shape: f32[2,256], index: 0, kind: input, shape index: {}]
  %s1 = inlined_call_operand.hbm [shape: f32[2,256], index: 1, kind: input, shape index: {}]
  %s2 = inlined_call_operand.vmem [shape: f32[1,256], index: 2, kind: input, shape index: {}]
  %s3 = inlined_call_operand.vmem [shape: f32[1,256], index: 3, kind: input, shape index: {}]
  %s4 = inlined_call_operand.vmem [shape: f32[1,256], index: 4, kind: input, shape index: {}]
  %s5 = inlined_call_operand.vmem [shape: f32[1,256], index: 5, kind: input, shape index: {}]
  %s6 = inlined_call_operand.hbm [shape: f32[2,256], index: 6, kind: output, shape index: {0}]
  %s7 = inlined_call_operand.hbm [shape: f32[2,256], index: 7, kind: output, shape index: {1}]
  %8 = xla_tuple %s6, %s7
  %s9 = sld [smem:[#allocation0]]
  $region50: #{tpu_custom_call.1} parent=0
    _
  %s11 = ssub.s32 1, %s9
  %s12 = scalar_select 0, %s11, %s9
  $region1: #{tpu_custom_call.1} parent=0
    #allocation2 [shape = 'u8[2048]{0}', space=vmem, size = 0x800, scoped, tag = 'input window, operand 0, single buffered']
    #allocation3 [shape = 's32[1]{0}', space=sflag, size = 0x4, scoped, tag = 'scoped memory for tpu_custom_call.1']
    #allocation4 [shape = 's32[1]{0}', space=sflag, size = 0x4, scoped, tag = 'scoped memory for tpu_custom_call.1']
    #allocation5 [shape = 'u8[2048]{0}', space=vmem, size = 0x800, scoped, tag = 'input window, operand 1, single buffered']
    #allocation6 [shape = 's32[1]{0}', space=sflag, size = 0x4, scoped, tag = 'scoped memory for tpu_custom_call.1']
    #allocation7 [shape = 'u8[2048]{0}', space=vmem, size = 0x800, scoped, tag = 'output window, operand 0, single buffered']
    #allocation8 [shape = 'u8[2048]{0}', space=vmem, size = 0x800, scoped, tag = 'output window, operand 1, single buffered']
    #allocation9 [shape = 's32[1]{0}', space=sflag, size = 0x4, scoped, tag = 'scoped memory for tpu_custom_call.1']
    %13 = vsyncpa [#allocation3], 0
    %14 = vsyncpa [#allocation6], 0
    %15 = vsyncpa [#allocation4], 0
    %16 = vsyncpa [#allocation9], 0
    // Predicated region
    $region2: #{tpu_custom_call.1} parent=1 // pred_check
      _
    $region3: #{tpu_custom_call.1} parent=1 // pred_check_branch
      %18 = sbr.rel (0) target = $region5
    $region4: #{tpu_custom_call.1} parent=1 // pred_region
      %s20 = ssub.s32 64, 64
      %21 = vsyncadd [#allocation3], %s20
      %s23 = sshll.u32 [#allocation2], 4
      %s24 = int_to_ptr.vmem [resolvable:$true] %s23
      %26 = dma.hbm_to_vmem [thread:$0]  %s0, 64, %s24, [#allocation3]
    $region5: #{tpu_custom_call.1} parent=1 // pred_fallthru
      _
    // Predicated region
    $region6: #{tpu_custom_call.1} parent=1 // pred_check
      _
    $region7: #{tpu_custom_call.1} parent=1 // pred_check_branch
      %28 = sbr.rel (0) target = $region9
    $region8: #{tpu_custom_call.1} parent=1 // pred_region
      %s30 = ssub.s32 64, 64
      %31 = vsyncadd [#allocation6], %s30
      %s33 = sshll.u32 [#allocation5], 4
      %s34 = int_to_ptr.vmem [resolvable:$true] %s33
      %36 = dma.hbm_to_vmem [thread:$0]  %s1, 64, %s34, [#allocation6]
    $region9: #{tpu_custom_call.1} parent=1 // pred_fallthru
      _
    // Predicated region
    $region10: #{tpu_custom_call.1} parent=1 // pred_check
      _
    $region11: #{tpu_custom_call.1} parent=1 // pred_check_branch
      %38 = sbr.rel (0) target = $region13
    $region12: #{tpu_custom_call.1} parent=1 // pred_region
      _
    $region13: #{tpu_custom_call.1} parent=1 // pred_fallthru
      _
    // Predicated region
    $region14: #{tpu_custom_call.1} parent=1 // pred_check
      _
    $region15: #{tpu_custom_call.1} parent=1 // pred_check_branch
      %40 = sbr.rel (0) target = $region17
    $region16: #{tpu_custom_call.1} parent=1 // pred_region
      _
    $region17: #{tpu_custom_call.1} parent=1 // pred_fallthru
      _
    // Predicated region
    $region18: #{tpu_custom_call.1} parent=1 // pred_check
      _
    $region19: #{tpu_custom_call.1} parent=1 // pred_check_branch
      %42 = sbr.rel (0) target = $region21
    $region20: #{tpu_custom_call.1} parent=1 // pred_region
      _
    $region21: #{tpu_custom_call.1} parent=1 // pred_fallthru
      _
    // Predicated region
    $region22: #{tpu_custom_call.1} parent=1 // pred_check
      _
    $region23: #{tpu_custom_call.1} parent=1 // pred_check_branch
      %44 = sbr.rel (0) target = $region25
    $region24: #{tpu_custom_call.1} parent=1 // pred_region
      _
    $region25: #{tpu_custom_call.1} parent=1 // pred_fallthru
      _
    // Predicated region
    $region26: #{tpu_custom_call.1} parent=1 // pred_check
      _
    $region27: #{tpu_custom_call.1} parent=1 // pred_check_branch
      %46 = sbr.rel (0) target = $region29
    $region28: #{tpu_custom_call.1} parent=1 // pred_region
      %47 = dma.done [#allocation3], 64
    $region29: #{tpu_custom_call.1} parent=1 // pred_fallthru
      _
    // Predicated region
    $region30: #{tpu_custom_call.1} parent=1 // pred_check
      _
    $region31: #{tpu_custom_call.1} parent=1 // pred_check_branch
      %49 = sbr.rel (0) target = $region33
    $region32: #{tpu_custom_call.1} parent=1 // pred_region
      %50 = dma.done [#allocation6], 64
    $region33: #{tpu_custom_call.1} parent=1 // pred_fallthru
      _
    %v51 = vld [vmem:[#allocation2] sm:$0xf]
    %v52 = vld [vmem:[#allocation5] sm:$0xf]
    %v53 = vld [vmem:[%s2] sm:$0x3]
    %v54 = vld [vmem:[%s3] sm:$0x3]
    %v55 = vld [vmem:[%s4] sm:$0x3]
    %v56 = vld [vmem:[%s5] sm:$0x3]
    %v57 = vlaneseq
    %v58 = vshrl.u32 %v57, 7
    %v59 = vcvt.s32.f32 %v58
    %v60 = vmul.f32 %v59, 2.0
    %v61 = vsub.f32 1.0, %v60
    %v63 = vlaneseq
    %v64 = vshrl.u32 %v63, 7
    %v65 = vsub.s32 0, %v64
    %v66 = vrot.slane %v54, %v65
    %v67 = vlaneseq
    %v68 = vshrl.u32 %v67, 7
    %v69 = vsub.s32 1, %v68
    %v70 = vrot.slane %v54, %v69
    %v73 = vmul.f32 %v61, %v66
    %v74 = vmul.f32 %v61, %v70
    %v76 = vlaneseq
    %v77 = vshrl.u32 %v76, 7
    %v78 = vsub.s32 0, %v77
    %v79 = vrot.slane %v53, %v78
    %v80 = vlaneseq
    %v81 = vshrl.u32 %v80, 7
    %v82 = vsub.s32 1, %v81
    %v83 = vrot.slane %v53, %v82
    %v84 = vcombine.low %v79, %v83
    %v86 = vunpack.c.l.s4 1983009808
    %v87 = vunpack.c.0.s8 %v86
    %v88 = vlaneseq
    %v89 = vshrl.u32 %v88, 7
    %v90 = vsub.s32 %v87, %v89
    %v91 = vrot.slane %v84, %v90
    %v93 = vmul.f32 %v51, %v91
    %v96 = vcombine.low %v73, %v74
    %v98 = vunpack.c.l.s4 1983009808
    %v99 = vunpack.c.0.s8 %v98
    %v100 = vlaneseq
    %v101 = vshrl.u32 %v100, 7
    %v102 = vsub.s32 %v99, %v101
    %v103 = vrot.slane %v96, %v102
    %v105 = vmul.f32 %v52, %v103
    %v106 = vsub.f32 %v93, %v105
    %v107 = vmul.f32 %v51, %v103
    %v108 = vmul.f32 %v52, %v91
    %v109 = vadd.f32 %v107, %v108
    %v111 = vlaneseq
    %v112 = vshrl.u32 %v111, 7
    %v113 = vsub.s32 0, %v112
    %v114 = vrot.slane %v56, %v113
    %v115 = vlaneseq
    %v116 = vshrl.u32 %v115, 7
    %v117 = vsub.s32 1, %v116
    %v118 = vrot.slane %v56, %v117
    %v123 = vunpack.c.l.s4 1983009808
    %v124 = vunpack.c.0.s8 %v123
    %v125 = vlaneseq
    %v126 = vshrl.u32 %v125, 7
    %v127 = vsub.s32 %v124, %v126
    %v128 = vrot.slane %v109, %v127
    %v129 = vcombine.high %v128, %v128
    %v132 = vmul.f32 %v114, %v128
    %v133 = vmul.f32 %v118, %v129
    %v135 = vlaneseq
    %v136 = vshrl.u32 %v135, 7
    %v137 = vsub.s32 0, %v136
    %v138 = vrot.slane %v55, %v137
    %v139 = vlaneseq
    %v140 = vshrl.u32 %v139, 7
    %v141 = vsub.s32 1, %v140
    %v142 = vrot.slane %v55, %v141
    %v145 = vadd.f32 %v138, %v132
    %v146 = vadd.f32 %v142, %v133
    %v149 = vcombine.low %v145, %v146
    %v151 = vunpack.c.l.s4 1983009808
    %v152 = vunpack.c.0.s8 %v151
    %v153 = vlaneseq
    %v154 = vshrl.u32 %v153, 7
    %v155 = vsub.s32 %v152, %v154
    %v156 = vrot.slane %v149, %v155
    %158 = vst [vmem:[#allocation7] sm:$0xf] %v156
    %v161 = vunpack.c.l.s4 1983009808
    %v162 = vunpack.c.0.s8 %v161
    %v163 = vlaneseq
    %v164 = vshrl.u32 %v163, 7
    %v165 = vsub.s32 %v162, %v164
    %v166 = vrot.slane %v106, %v165
    %v167 = vcombine.high %v166, %v166
    %v170 = vmul.f32 %v114, %v166
    %v171 = vmul.f32 %v118, %v167
    %v172 = vsub.f32 0.0, %v170
    %v173 = vsub.f32 0.0, %v171
    %v176 = vcombine.low %v172, %v173
    %v178 = vunpack.c.l.s4 1983009808
    %v179 = vunpack.c.0.s8 %v178
    %v180 = vlaneseq
    %v181 = vshrl.u32 %v180, 7
    %v182 = vsub.s32 %v179, %v181
    %v183 = vrot.slane %v176, %v182
    %185 = vst [vmem:[#allocation8] sm:$0xf] %v183
    // Predicated region
    $region34: #{tpu_custom_call.1} parent=1 // pred_check
      _
    $region35: #{tpu_custom_call.1} parent=1 // pred_check_branch
      %187 = sbr.rel (0) target = $region37
    $region36: #{tpu_custom_call.1} parent=1 // pred_region
      %s189 = ssub.s32 64, 64
      %190 = vsyncadd [#allocation4], %s189
      %s192 = sshll.u32 [#allocation7], 4
      %s193 = int_to_ptr.vmem [resolvable:$true] %s192
      %195 = dma.vmem_to_hbm [thread:$0]  %s193, 64, %s6, [#allocation4]
    $region37: #{tpu_custom_call.1} parent=1 // pred_fallthru
      _
    // Predicated region
    $region38: #{tpu_custom_call.1} parent=1 // pred_check
      _
    $region39: #{tpu_custom_call.1} parent=1 // pred_check_branch
      %197 = sbr.rel (0) target = $region41
    $region40: #{tpu_custom_call.1} parent=1 // pred_region
      %s199 = ssub.s32 64, 64
      %200 = vsyncadd [#allocation9], %s199
      %s202 = sshll.u32 [#allocation8], 4
      %s203 = int_to_ptr.vmem [resolvable:$true] %s202
      %205 = dma.vmem_to_hbm [thread:$0]  %s203, 64, %s7, [#allocation9]
    $region41: #{tpu_custom_call.1} parent=1 // pred_fallthru
      _
    // Predicated region
    $region42: #{tpu_custom_call.1} parent=1 // pred_check
      _
    $region43: #{tpu_custom_call.1} parent=1 // pred_check_branch
      %207 = sbr.rel (0) target = $region45
    $region44: #{tpu_custom_call.1} parent=1 // pred_region
      %208 = dma.done [#allocation4], 64
    $region45: #{tpu_custom_call.1} parent=1 // pred_fallthru
      _
    // Predicated region
    $region46: #{tpu_custom_call.1} parent=1 // pred_check
      _
    $region47: #{tpu_custom_call.1} parent=1 // pred_check_branch
      %210 = sbr.rel (0) target = $region49
    $region48: #{tpu_custom_call.1} parent=1 // pred_region
      %211 = dma.done [#allocation9], 64
    $region49: #{tpu_custom_call.1} parent=1 // pred_fallthru
      _
    %212 = vsyncpa [#allocation3], 1
    %213 = vsyncpa [#allocation6], 1
    %214 = vsyncpa [#allocation4], 1
    %215 = vsyncpa [#allocation9], 1

</llo_original>
